<compile_context>
chip_gen: v5e
topology: v5e:2x2
jax: 0.10.0
libtpu: 0.0.40
codegen_flags: <defaults>
</compile_context>

<pallas_src>
import jax
import jax.numpy as jnp
from jax.experimental import pallas as pl
from jax.experimental.pallas import tpu as pltpu


# ---------------------------------------------------------------------------
# One-time parameter prep (hoisted out of the per-call path).
# ---------------------------------------------------------------------------
def prepare_patch_embed_params(weight, bias, patch_size, compute_dtype=jnp.bfloat16):
    """weight: (E, C, pt, ph, pw) f32 (Conv3d layout), bias: (E,) f32."""
    pt, ph, pw = patch_size
    E, C = weight.shape[0], weight.shape[1]
    K = C * pt * ph * pw
    # (K, E) with K ordered (c, dt, dh, dw) == Conv3d reduction order.
    w_flat = weight.reshape(E, K).T.astype(compute_dtype)
    bias2d = bias.reshape(1, E).astype(jnp.float32)
    # NOTE: for embed_dim that is NOT a multiple of 128 (matters most on v5e's single
    # vector-store slot), group g rows into a lane-dense (rows/g, g*E) slab instead of
    # emitting narrow masked stores. Demo/production E here is a multiple of 128.
    return {"w_flat": w_flat, "bias2d": bias2d}


# ---------------------------------------------------------------------------
# Kernel: one MXU dot per grid step, f32 accumulation, f32 bias, lane-dense store.
# ---------------------------------------------------------------------------
def _gemm_bias_kernel(x_ref, w_ref, b_ref, o_ref):
    acc = jnp.dot(x_ref[...], w_ref[...], preferred_element_type=jnp.float32)
    o_ref[...] = (acc + b_ref[...]).astype(o_ref.dtype)


# ---------------------------------------------------------------------------
# Generation-aware sizing helpers.
# ---------------------------------------------------------------------------
def _vmem_limit_bytes():
    try:
        phys = int(pltpu.get_tpu_info().vmem_capacity_bytes)
    except Exception:
        phys = 64 << 20  # assume v7x-sized VMEM if the query is unavailable
    # ~3/4 of physical: 48 MiB on v7x (64 MiB), 96 MiB on v5e/v6e (128 MiB).
    return min((phys * 3) // 4, 112 << 20)


def _choose_tm(M, E, out_itemsize, *, target_bytes=4 << 20, min_rows=512, max_rows=8192):
    """Rows per grid step: multi-MiB output blocks, >= 8 steps when M allows."""
    tm = target_bytes // max(E * out_itemsize, 1)
    tm = max(min_rows, min(tm, max_rows))
    # Prefer >= 8 grid steps (pipeline overlap; both v7x TCs via the 'parallel' axis),
    # as long as each step keeps at least `min_rows` rows.
    if M // 8 >= min_rows:
        tm = min(tm, M // 8)
    tm = min(tm, M)
    return max(8, (tm // 8) * 8)


# ---------------------------------------------------------------------------
# Patchify (pure layout plumbing: reshape + transpose, done by XLA).
# ---------------------------------------------------------------------------
def _patchify(x, patch_size):
    pt, ph, pw = patch_size
    B, C, T, H, W = x.shape
    Tp, Hp, Wp = T // pt, H // ph, W // pw
    K = C * pt * ph * pw
    xp = x.reshape(B, C, Tp, pt, Hp, ph, Wp, pw)
    xp = xp.transpose(0, 2, 4, 6, 1, 3, 5, 7)          # (B, Tp, Hp, Wp, C, pt, ph, pw)
    return xp.reshape(B * Tp * Hp * Wp, K), (Tp, Hp, Wp)


# ---------------------------------------------------------------------------
# Tiled, lane-dense GEMM + bias via pallas_call.
# ---------------------------------------------------------------------------
def patch_embed_matmul(patches, w_flat, bias2d, *, out_dtype):
    M, K = patches.shape
    E = w_flat.shape[1]
    out_itemsize = jnp.dtype(out_dtype).itemsize

    tm = _choose_tm(M, E, out_itemsize)
    Mp = pl.cdiv(M, tm) * tm
    if Mp != M:
        patches = jnp.pad(patches, ((0, Mp - M), (0, 0)))

    cost = pl.CostEstimate(
        flops=2 * Mp * K * E,
        transcendentals=0,
        bytes_accessed=(
            Mp * K * patches.dtype.itemsize
            + K * E * w_flat.dtype.itemsize
            + bias2d.size * bias2d.dtype.itemsize
            + Mp * E * out_itemsize
        ),
    )

    out = pl.pallas_call(
        _gemm_bias_kernel,
        out_shape=jax.ShapeDtypeStruct((Mp, E), out_dtype),
        grid_spec=pltpu.PrefetchScalarGridSpec(
            num_scalar_prefetch=0,
            grid=(Mp // tm,),
            in_specs=[
                pl.BlockSpec((tm, K), lambda i: (i, 0)),   # streamed LHS tiles
                pl.BlockSpec((K, E), lambda i: (0, 0)),    # resident weight
                pl.BlockSpec((1, E), lambda i: (0, 0)),    # resident f32 bias
            ],
            out_specs=pl.BlockSpec((tm, E), lambda i: (i, 0)),
        ),
        compiler_params=pltpu.CompilerParams(
            dimension_semantics=("parallel",),
            vmem_limit_bytes=_vmem_limit_bytes(),
        ),
        cost_estimate=cost,
    )(patches, w_flat, bias2d)
    return out[:M] if Mp != M else out


# ---------------------------------------------------------------------------
# PatchEmbed forward (norm_layer=None -> Identity).
# ---------------------------------------------------------------------------
def patch_embed_forward(x, params, patch_size, *, flatten=True):
    w_flat, bias2d = params["w_flat"], params["bias2d"]
    B = x.shape[0]
    E = w_flat.shape[1]
    patches, (Tp, Hp, Wp) = _patchify(x, patch_size)
    patches = patches.astype(w_flat.dtype)             # MXU-native bf16 operands
    out = patch_embed_matmul(patches, w_flat, bias2d, out_dtype=x.dtype)
    out = out.reshape(B, Tp * Hp * Wp, E)               # (B, N, E): flatten(2).transpose(1,2)
    if not flatten:
        out = out.reshape(B, Tp, Hp, Wp, E).transpose(0, 4, 1, 2, 3)
    return out


# ---------------------------------------------------------------------------
# Pure-JAX reference (same bf16-rounded inputs, f32 math).
# ---------------------------------------------------------------------------
def patch_embed_reference(x, w_flat, bias2d, patch_size):
    patches, (Tp, Hp, Wp) = _patchify(x, patch_size)
    B = x.shape[0]
    ref = patches.astype(jnp.float32) @ w_flat.astype(jnp.float32) + bias2d.astype(jnp.float32)
    return ref.reshape(B, Tp * Hp * Wp, -1)


def _check(out, ref):
    assert out.shape == ref.shape, (out.shape, ref.shape)
    ok = jnp.allclose(out.astype(jnp.float32), ref, atol=3e-2, rtol=3e-2)
    if not bool(ok):
        raise AssertionError("kernel output does not match reference")


# ---------------------------------------------------------------------------
# Main
# ---------------------------------------------------------------------------
if __name__ == "__main__":
    patch_size = (2, 2, 2)
    in_chans = 4
    embed_dim = 128          # multiple of 128 -> lane-dense output stores
    B, T, H, W = 2, 4, 16, 16

    key = jax.random.PRNGKey(0)
    kx, kw, kb = jax.random.split(key, 3)
    fan_in = in_chans * patch_size[0] * patch_size[1] * patch_size[2]
    bound = 1.0 / (fan_in ** 0.5)
    weight = jax.random.uniform(
        kw, (embed_dim, in_chans, *patch_size), jnp.float32, -bound, bound
    )
    bias = jax.random.uniform(kb, (embed_dim,), jnp.float32, -bound, bound)
    # Activations in bf16 (MXU-native dtype; halves HBM/VMEM traffic).
    x = jax.random.normal(kx, (B, in_chans, T, H, W), jnp.float32).astype(jnp.bfloat16)

    params = prepare_patch_embed_params(weight, bias, patch_size)
    ref = patch_embed_reference(x, params["w_flat"], params["bias2d"], patch_size)

    out = jax.block_until_ready(
        patch_embed_forward(x, params, patch_size, flatten=True)
    )
    _check(out, ref)   # verification is intentionally NOT wrapped in try/except

    print("KERNEL_OK")
</pallas_src>

<mosaic_0001>
module attributes {stable_mosaic.version = 11 : i64} {
  func.func @_gemm_bias_kernel(%arg0: i32, %arg1: memref<256x32xbf16, #tpu.memory_space<vmem>>, %arg2: memref<32x128xbf16, #tpu.memory_space<vmem>>, %arg3: memref<1x128xf32, #tpu.memory_space<vmem>>, %arg4: memref<256x128xbf16, #tpu.memory_space<vmem>>) attributes {dimension_semantics = [#tpu.dimension_semantics<parallel>], iteration_bounds = array<i64: 1>, scalar_prefetch = 0 : i64, scratch_operands = 0 : i64, tpu.core_type = #tpu.core_type<tc>, window_params = [{transform_indices = @transform_0, window_bounds = array<i64: 256, 32>}, {pipeline_mode = #tpu.pipeline_mode<synchronous>, transform_indices = @transform_1, window_bounds = array<i64: 32, 128>}, {pipeline_mode = #tpu.pipeline_mode<synchronous>, transform_indices = @transform_2, window_bounds = array<i64: 1, 128>}, {transform_indices = @transform_3, window_bounds = array<i64: 256, 128>}]} {
    %c0 = arith.constant 0 : index
    %c0_0 = arith.constant 0 : index
    %0 = vector.load %arg1[%c0, %c0_0] : memref<256x32xbf16, #tpu.memory_space<vmem>>, vector<256x32xbf16>
    %c0_1 = arith.constant 0 : index
    %c0_2 = arith.constant 0 : index
    %1 = vector.load %arg2[%c0_1, %c0_2] : memref<32x128xbf16, #tpu.memory_space<vmem>>, vector<32x128xbf16>
    %cst = arith.constant dense<0.000000e+00> : vector<256x128xf32>
    %2 = tpu.matmul %0, %1, %cst {dimension_numbers = #tpu.dot_dimension_numbers<[1], [0], [0], [1], [0, 0, 1, 1], [], []>} : vector<256x32xbf16>, vector<32x128xbf16>, vector<256x128xf32> -> vector<256x128xf32>
    %c0_3 = arith.constant 0 : index
    %c0_4 = arith.constant 0 : index
    %3 = vector.load %arg3[%c0_3, %c0_4] : memref<1x128xf32, #tpu.memory_space<vmem>>, vector<1x128xf32>
    %4 = vector.broadcast %3 : vector<1x128xf32> to vector<256x128xf32>
    %5 = arith.addf %2, %4 : vector<256x128xf32>
    %6 = arith.truncf %5 : vector<256x128xf32> to vector<256x128xbf16>
    %c0_5 = arith.constant 0 : index
    %c0_6 = arith.constant 0 : index
    %7 = vector.load %arg4[%c0_5, %c0_6] : memref<256x128xbf16, #tpu.memory_space<vmem>>, vector<256x128xbf16>
    tpu.vector_store %arg4[%c0_5, %c0_6], %6 {strides = array<i32>} : memref<256x128xbf16, #tpu.memory_space<vmem>>, vector<256x128xbf16>,
    return
  }
  func.func @transform_0(%arg0: i32) -> (i32, i32) {
    %c0_i32 = arith.constant 0 : i32
    %c0_i32_0 = arith.constant 0 : i32
    return %arg0, %c0_i32 : i32, i32
  }
  func.func @transform_1(%arg0: i32) -> (i32, i32) {
    %c0_i32 = arith.constant 0 : i32
    %c0_i32_0 = arith.constant 0 : i32
    %c0_i32_1 = arith.constant 0 : i32
    return %c0_i32, %c0_i32_0 : i32, i32
  }
  func.func @transform_2(%arg0: i32) -> (i32, i32) {
    %c0_i32 = arith.constant 0 : i32
    %c0_i32_0 = arith.constant 0 : i32
    %c0_i32_1 = arith.constant 0 : i32
    return %c0_i32, %c0_i32_0 : i32, i32
  }
  func.func @transform_3(%arg0: i32) -> (i32, i32) {
    %c0_i32 = arith.constant 0 : i32
    %c0_i32_0 = arith.constant 0 : i32
    return %arg0, %c0_i32 : i32, i32
  }
}

</mosaic_0001>

<llo_original>
// kernel: tpu_custom_call.1
$region0: #{tpu_custom_call.1}
  #allocation0 [shape = 'u32[]', space=smem, size = 0x4, offset = 0x4, fixed_abs, tag = 'smem constant byte address 0x4 - core index']
  #allocation1 [shape = 'u32[72,128]{1,0:T(1,128)}', space=vmem, size = 0x9000, scoped, tag = 'internal scratch']
  %s0 = inlined_call_operand.vmem [shape: bf16[256,32], index: 0, kind: input, shape index: {}]
  %s1 = inlined_call_operand.vmem [shape: bf16[32,128], index: 1, kind: input, shape index: {}]
  %s2 = inlined_call_operand.vmem [shape: f32[1,128], index: 2, kind: input, shape index: {}]
  %s3 = inlined_call_operand.hbm [shape: bf16[256,128], index: 3, kind: output, shape index: {}]
  %s4 = sld [smem:[#allocation0]]
  $region22: #{tpu_custom_call.1} parent=0
    _
  %s6 = ssub.s32 1, %s4
  %s7 = scalar_select 0, %s6, %s4
  $region1: #{tpu_custom_call.1} parent=0
    #allocation2 [shape = 'u8[65536]{0}', space=vmem, size = 0x10000, scoped, tag = 'output window, operand 0, single buffered']
    #allocation3 [shape = 's32[1]{0}', space=sflag, size = 0x4, scoped, tag = 'scoped memory for tpu_custom_call.1']
    %8 = vsyncpa [#allocation3], 0
    // Predicated region
    $region2: #{tpu_custom_call.1} parent=1 // pred_check
      _
    $region3: #{tpu_custom_call.1} parent=1 // pred_check_branch
      %10 = sbr.rel (0) target = $region5
    $region4: #{tpu_custom_call.1} parent=1 // pred_region
      _
    $region5: #{tpu_custom_call.1} parent=1 // pred_fallthru
      _
    // Predicated region
    $region6: #{tpu_custom_call.1} parent=1 // pred_check
      _
    $region7: #{tpu_custom_call.1} parent=1 // pred_check_branch
      %12 = sbr.rel (0) target = $region9
    $region8: #{tpu_custom_call.1} parent=1 // pred_region
      _
    $region9: #{tpu_custom_call.1} parent=1 // pred_fallthru
      _
    // Predicated region
    $region10: #{tpu_custom_call.1} parent=1 // pred_check
      _
    $region11: #{tpu_custom_call.1} parent=1 // pred_check_branch
      %14 = sbr.rel (0) target = $region13
    $region12: #{tpu_custom_call.1} parent=1 // pred_region
      _
    $region13: #{tpu_custom_call.1} parent=1 // pred_fallthru
      _
    %v16 = vld [vmem:[%s0] sm:$0xf]
    %v17 = vld [vmem:[%s0 + $0x4] sm:$0xf]
    %v18 = vld [vmem:[%s0 + $0x8] sm:$0xf]
    %v19 = vld [vmem:[%s0 + $0xc] sm:$0xf]
    %v20 = vld [vmem:[%s0 + $0x10] sm:$0xf]
    %v21 = vld [vmem:[%s0 + $0x14] sm:$0xf]
    %v22 = vld [vmem:[%s0 + $0x18] sm:$0xf]
    %v23 = vld [vmem:[%s0 + $0x1c] sm:$0xf]
    %v24 = vld [vmem:[%s0 + $0x20] sm:$0xf]
    %v25 = vld [vmem:[%s0 + $0x24] sm:$0xf]
    %v26 = vld [vmem:[%s0 + $0x28] sm:$0xf]
    %v27 = vld [vmem:[%s0 + $0x2c] sm:$0xf]
    %v28 = vld [vmem:[%s0 + $0x30] sm:$0xf]
    %v29 = vld [vmem:[%s0 + $0x34] sm:$0xf]
    %v30 = vld [vmem:[%s0 + $0x38] sm:$0xf]
    %v31 = vld [vmem:[%s0 + $0x3c] sm:$0xf]
    %v32 = vld [vmem:[%s0 + $0x40] sm:$0xf]
    %v33 = vld [vmem:[%s0 + $0x44] sm:$0xf]
    %v34 = vld [vmem:[%s0 + $0x48] sm:$0xf]
    %v35 = vld [vmem:[%s0 + $0x4c] sm:$0xf]
    %v36 = vld [vmem:[%s0 + $0x50] sm:$0xf]
    %v37 = vld [vmem:[%s0 + $0x54] sm:$0xf]
    %v38 = vld [vmem:[%s0 + $0x58] sm:$0xf]
    %v39 = vld [vmem:[%s0 + $0x5c] sm:$0xf]
    %v40 = vld [vmem:[%s0 + $0x60] sm:$0xf]
    %v41 = vld [vmem:[%s0 + $0x64] sm:$0xf]
    %v42 = vld [vmem:[%s0 + $0x68] sm:$0xf]
    %v43 = vld [vmem:[%s0 + $0x6c] sm:$0xf]
    %v44 = vld [vmem:[%s0 + $0x70] sm:$0xf]
    %v45 = vld [vmem:[%s0 + $0x74] sm:$0xf]
    %v46 = vld [vmem:[%s0 + $0x78] sm:$0xf]
    %v47 = vld [vmem:[%s0 + $0x7c] sm:$0xf]
    %v48 = vld [vmem:[%s1] sm:$0xf]
    %v49 = vld [vmem:[%s1 + $0x4] sm:$0xf]
    %v50 = vld [vmem:[%s1 + $0x8] sm:$0xf]
    %v51 = vld [vmem:[%s1 + $0xc] sm:$0xf]
    %v52 = vld [vmem:[%s2] sm:$0x1]
    %v54 = vperm.slane %v52, 0
    %v88 = vunpack.c.l.b16 %v16
    %v89 = vunpack.c.l.b16 %v17
    %v90 = vunpack.c.l.b16 %v18
    %v91 = vunpack.c.l.b16 %v19
    %v92 = vunpack.c.l.b16 %v20
    %v93 = vunpack.c.l.b16 %v21
    %v94 = vunpack.c.l.b16 %v22
    %v95 = vunpack.c.l.b16 %v23
    %v96 = vunpack.c.l.b16 %v24
    %v97 = vunpack.c.l.b16 %v25
    %v98 = vunpack.c.l.b16 %v26
    %v99 = vunpack.c.l.b16 %v27
    %v100 = vunpack.c.l.b16 %v28
    %v101 = vunpack.c.l.b16 %v29
    %v102 = vunpack.c.l.b16 %v30
    %v103 = vunpack.c.l.b16 %v31
    %v104 = vunpack.c.l.b16 %v32
    %v105 = vunpack.c.l.b16 %v33
    %v106 = vunpack.c.l.b16 %v34
    %v107 = vunpack.c.l.b16 %v35
    %v108 = vunpack.c.l.b16 %v36
    %v109 = vunpack.c.l.b16 %v37
    %v110 = vunpack.c.l.b16 %v38
    %v111 = vunpack.c.l.b16 %v39
    %v112 = vunpack.c.l.b16 %v40
    %v113 = vunpack.c.l.b16 %v41
    %v114 = vunpack.c.l.b16 %v42
    %v115 = vunpack.c.l.b16 %v43
    %v116 = vunpack.c.l.b16 %v44
    %v117 = vunpack.c.l.b16 %v45
    %v118 = vunpack.c.l.b16 %v46
    %v119 = vunpack.c.l.b16 %v47
    %v120 = vpack.c.b16 %v89, %v88
    %v121 = vpack.c.b16 %v91, %v90
    %v122 = vpack.c.b16 %v93, %v92
    %v123 = vpack.c.b16 %v95, %v94
    %v124 = vpack.c.b16 %v97, %v96
    %v125 = vpack.c.b16 %v99, %v98
    %v126 = vpack.c.b16 %v101, %v100
    %v127 = vpack.c.b16 %v103, %v102
    %v128 = vpack.c.b16 %v105, %v104
    %v129 = vpack.c.b16 %v107, %v106
    %v130 = vpack.c.b16 %v109, %v108
    %v131 = vpack.c.b16 %v111, %v110
    %v132 = vpack.c.b16 %v113, %v112
    %v133 = vpack.c.b16 %v115, %v114
    %v134 = vpack.c.b16 %v117, %v116
    %v135 = vpack.c.b16 %v119, %v118
    %v140 = vunpack.c.l.b16 %v48
    %v141 = vunpack.c.l.b16 %v49
    %v142 = vunpack.c.l.b16 %v50
    %v143 = vunpack.c.l.b16 %v51
    %v144 = vpack.c.b16 %v141, %v140
    %v145 = vpack.c.b16 %v143, %v142
    %vm148 = vcmask 261120
    %v150 = vsel %vm148, %v120, 0
    %v153 = vsel %vm148, %v121, 0
    %v156 = vsel %vm148, %v122, 0
    %v159 = vsel %vm148, %v123, 0
    %v162 = vsel %vm148, %v124, 0
    %v165 = vsel %vm148, %v125, 0
    %v168 = vsel %vm148, %v126, 0
    %v171 = vsel %vm148, %v127, 0
    %v174 = vsel %vm148, %v128, 0
    %v177 = vsel %vm148, %v129, 0
    %v180 = vsel %vm148, %v130, 0
    %v183 = vsel %vm148, %v131, 0
    %v186 = vsel %vm148, %v132, 0
    %v189 = vsel %vm148, %v133, 0
    %v192 = vsel %vm148, %v134, 0
    %v195 = vsel %vm148, %v135, 0
    %197 = vmatpush.bf16.msra.mxu0 0
    %198 = vmatpush.bf16.msra.mxu0 0
    %199 = vmatpush.bf16.msra.mxu0 0
    %200 = vmatpush.bf16.msra.mxu0 0
    %201 = vmatpush.bf16.msra.mxu0 0
    %202 = vmatpush.bf16.msra.mxu0 0
    %203 = vmatpush.bf16.msra.mxu0 %v145
    %204 = vmatpush.bf16.msra.mxu0 %v144
    %205 = vmatmul.bf16.gmra.mxu0 %v150
    %v206 = vpop.f32.mrf.mxu0
    %v207 = vadd.f32 %v54, %v206
    %v208 = vpop.f32.mrf.mxu0
    %v209 = vadd.f32 %v54, %v208
    %210 = vmatmul.bf16.gmra.mxu0 %v153
    %v211 = vpop.f32.mrf.mxu0
    %v212 = vadd.f32 %v54, %v211
    %v213 = vpop.f32.mrf.mxu0
    %v214 = vadd.f32 %v54, %v213
    %215 = vmatmul.bf16.gmra.mxu0 %v156
    %v216 = vpop.f32.mrf.mxu0
    %v217 = vadd.f32 %v54, %v216
    %v218 = vpop.f32.mrf.mxu0
    %v219 = vadd.f32 %v54, %v218
    %220 = vmatmul.bf16.gmra.mxu0 %v159
    %v221 = vpop.f32.mrf.mxu0
    %v222 = vadd.f32 %v54, %v221
    %v223 = vpop.f32.mrf.mxu0
    %v224 = vadd.f32 %v54, %v223
    %225 = vmatmul.bf16.gmra.mxu0 %v162
    %v226 = vpop.f32.mrf.mxu0
    %v227 = vadd.f32 %v54, %v226
    %v228 = vpop.f32.mrf.mxu0
    %v229 = vadd.f32 %v54, %v228
    %230 = vmatmul.bf16.gmra.mxu0 %v165
    %v231 = vpop.f32.mrf.mxu0
    %v232 = vadd.f32 %v54, %v231
    %v233 = vpop.f32.mrf.mxu0
    %v234 = vadd.f32 %v54, %v233
    %235 = vmatmul.bf16.gmra.mxu0 %v168
    %v236 = vpop.f32.mrf.mxu0
    %v237 = vadd.f32 %v54, %v236
    %v238 = vpop.f32.mrf.mxu0
    %v239 = vadd.f32 %v54, %v238
    %240 = vmatmul.bf16.gmra.mxu0 %v171
    %v241 = vpop.f32.mrf.mxu0
    %v242 = vadd.f32 %v54, %v241
    %v243 = vpop.f32.mrf.mxu0
    %v244 = vadd.f32 %v54, %v243
    %245 = vmatmul.bf16.gmra.mxu0 %v174
    %v246 = vpop.f32.mrf.mxu0
    %v247 = vadd.f32 %v54, %v246
    %v248 = vpop.f32.mrf.mxu0
    %v249 = vadd.f32 %v54, %v248
    %250 = vmatmul.bf16.gmra.mxu0 %v177
    %v251 = vpop.f32.mrf.mxu0
    %v252 = vadd.f32 %v54, %v251
    %v253 = vpop.f32.mrf.mxu0
    %v254 = vadd.f32 %v54, %v253
    %255 = vmatmul.bf16.gmra.mxu0 %v180
    %v256 = vpop.f32.mrf.mxu0
    %v257 = vadd.f32 %v54, %v256
    %v258 = vpop.f32.mrf.mxu0
    %v259 = vadd.f32 %v54, %v258
    %260 = vmatmul.bf16.gmra.mxu0 %v183
    %v261 = vpop.f32.mrf.mxu0
    %v262 = vadd.f32 %v54, %v261
    %v263 = vpop.f32.mrf.mxu0
    %v264 = vadd.f32 %v54, %v263
    %265 = vmatmul.bf16.gmra.mxu0 %v186
    %v266 = vpop.f32.mrf.mxu0
    %v267 = vadd.f32 %v54, %v266
    %v268 = vpop.f32.mrf.mxu0
    %v269 = vadd.f32 %v54, %v268
    %270 = vmatmul.bf16.gmra.mxu0 %v189
    %v271 = vpop.f32.mrf.mxu0
    %v272 = vadd.f32 %v54, %v271
    %v273 = vpop.f32.mrf.mxu0
    %v274 = vadd.f32 %v54, %v273
    %275 = vmatmul.bf16.gmra.mxu0 %v192
    %v276 = vpop.f32.mrf.mxu0
    %v277 = vadd.f32 %v54, %v276
    %v278 = vpop.f32.mrf.mxu0
    %v279 = vadd.f32 %v54, %v278
    %280 = vmatmul.bf16.gmra.mxu0 %v195
    %v281 = vpop.f32.mrf.mxu0
    %v282 = vadd.f32 %v54, %v281
    %v283 = vpop.f32.mrf.mxu0
    %v284 = vadd.f32 %v54, %v283
    %285 = vdwg.mxu0
    %v286 = vpack.c.bf16 %v207, %v207
    %v287 = vpack.c.bf16 %v209, %v209
    %v288 = vpack.c.bf16 %v212, %v212
    %v289 = vpack.c.bf16 %v214, %v214
    %v290 = vpack.c.bf16 %v217, %v217
    %v291 = vpack.c.bf16 %v219, %v219
    %v292 = vpack.c.bf16 %v222, %v222
    %v293 = vpack.c.bf16 %v224, %v224
    %v294 = vpack.c.bf16 %v227, %v227
    %v295 = vpack.c.bf16 %v229, %v229
    %v296 = vpack.c.bf16 %v232, %v232
    %v297 = vpack.c.bf16 %v234, %v234
    %v298 = vpack.c.bf16 %v237, %v237
    %v299 = vpack.c.bf16 %v239, %v239
    %v300 = vpack.c.bf16 %v242, %v242
    %v301 = vpack.c.bf16 %v244, %v244
    %v302 = vpack.c.bf16 %v247, %v247
    %v303 = vpack.c.bf16 %v249, %v249
    %v304 = vpack.c.bf16 %v252, %v252
    %v305 = vpack.c.bf16 %v254, %v254
    %v306 = vpack.c.bf16 %v257, %v257
    %v307 = vpack.c.bf16 %v259, %v259
    %v308 = vpack.c.bf16 %v262, %v262
    %v309 = vpack.c.bf16 %v264, %v264
    %v310 = vpack.c.bf16 %v267, %v267
    %v311 = vpack.c.bf16 %v269, %v269
    %v312 = vpack.c.bf16 %v272, %v272
    %v313 = vpack.c.bf16 %v274, %v274
    %v314 = vpack.c.bf16 %v277, %v277
    %v315 = vpack.c.bf16 %v279, %v279
    %v316 = vpack.c.bf16 %v282, %v282
    %v317 = vpack.c.bf16 %v284, %v284
    %318 = vst [vmem:[#allocation2] sm:$0xf] %v286
    %319 = vst [vmem:[#allocation2 + $0x4] sm:$0xf] %v287
    %320 = vst [vmem:[#allocation2 + $0x8] sm:$0xf] %v288
    %321 = vst [vmem:[#allocation2 + $0xc] sm:$0xf] %v289
    %322 = vst [vmem:[#allocation2 + $0x10] sm:$0xf] %v290
    %323 = vst [vmem:[#allocation2 + $0x14] sm:$0xf] %v291
    %324 = vst [vmem:[#allocation2 + $0x18] sm:$0xf] %v292
    %325 = vst [vmem:[#allocation2 + $0x1c] sm:$0xf] %v293
    %326 = vst [vmem:[#allocation2 + $0x20] sm:$0xf] %v294
    %327 = vst [vmem:[#allocation2 + $0x24] sm:$0xf] %v295
    %328 = vst [vmem:[#allocation2 + $0x28] sm:$0xf] %v296
    %329 = vst [vmem:[#allocation2 + $0x2c] sm:$0xf] %v297
    %330 = vst [vmem:[#allocation2 + $0x30] sm:$0xf] %v298
    %331 = vst [vmem:[#allocation2 + $0x34] sm:$0xf] %v299
    %332 = vst [vmem:[#allocation2 + $0x38] sm:$0xf] %v300
    %333 = vst [vmem:[#allocation2 + $0x3c] sm:$0xf] %v301
    %334 = vst [vmem:[#allocation2 + $0x40] sm:$0xf] %v302
    %335 = vst [vmem:[#allocation2 + $0x44] sm:$0xf] %v303
    %336 = vst [vmem:[#allocation2 + $0x48] sm:$0xf] %v304
    %337 = vst [vmem:[#allocation2 + $0x4c] sm:$0xf] %v305
    %338 = vst [vmem:[#allocation2 + $0x50] sm:$0xf] %v306
    %339 = vst [vmem:[#allocation2 + $0x54] sm:$0xf] %v307
    %340 = vst [vmem:[#allocation2 + $0x58] sm:$0xf] %v308
    %341 = vst [vmem:[#allocation2 + $0x5c] sm:$0xf] %v309
    %342 = vst [vmem:[#allocation2 + $0x60] sm:$0xf] %v310
    %343 = vst [vmem:[#allocation2 + $0x64] sm:$0xf] %v311
    %344 = vst [vmem:[#allocation2 + $0x68] sm:$0xf] %v312
    %345 = vst [vmem:[#allocation2 + $0x6c] sm:$0xf] %v313
    %346 = vst [vmem:[#allocation2 + $0x70] sm:$0xf] %v314
    %347 = vst [vmem:[#allocation2 + $0x74] sm:$0xf] %v315
    %348 = vst [vmem:[#allocation2 + $0x78] sm:$0xf] %v316
    %349 = vst [vmem:[#allocation2 + $0x7c] sm:$0xf] %v317
    // Predicated region
    $region14: #{tpu_custom_call.1} parent=1 // pred_check
      _
    $region15: #{tpu_custom_call.1} parent=1 // pred_check_branch
      %351 = sbr.rel (0) target = $region17
    $region16: #{tpu_custom_call.1} parent=1 // pred_region
      %353 = vsyncadd [#allocation3], 0
      %s354 = sshll.u32 [#allocation2], 4
      %s355 = int_to_ptr.vmem [resolvable:$true] %s354
      %s356 = sshll.u32 %s3, 4
      %s357 = int_to_ptr.hbm [resolvable:$true] %s356
      %362 = dma.vmem_to_hbm [thread:$0]  %s355, 2048, %s357, [#allocation3], 64, 64, 4
    $region17: #{tpu_custom_call.1} parent=1 // pred_fallthru
      _
    // Predicated region
    $region18: #{tpu_custom_call.1} parent=1 // pred_check
      _
    $region19: #{tpu_custom_call.1} parent=1 // pred_check_branch
      %364 = sbr.rel (0) target = $region21
    $region20: #{tpu_custom_call.1} parent=1 // pred_region
      %366 = dma.done [#allocation3], 2048
    $region21: #{tpu_custom_call.1} parent=1 // pred_fallthru
      _
    %367 = vsyncpa [#allocation3], 1

</llo_original>
